<compile_context>
chip_gen: v5e
topology: v5e:2x2
jax: 0.10.0
libtpu: 0.0.40
codegen_flags: <defaults>
</compile_context>

<pallas_src>
import functools

import jax
import jax.numpy as jnp
from jax.experimental import pallas as pl
from jax.experimental.pallas import tpu as pltpu


def _round_up(a, b):
    return ((a + b - 1) // b) * b


def _vmem_capacity_bytes():
    try:
        return int(pltpu.get_tpu_info().vmem_capacity_bytes)
    except Exception:
        return 64 * 1024 * 1024  # conservative (v7x per-TC physical VMEM)


def _inv_nm1(n):
    # torch.var(x, 0) is unbiased (ddof=1); a single-sample batch yields NaN in
    # PyTorch.  0 * nan = nan reproduces that without a trace-time ZeroDivision.
    return (1.0 / (n - 1)) if n > 1 else float("nan")


# ----------------------------------------------------------------------------
# Fast path: the whole batch for one feature tile fits in VMEM.
# ----------------------------------------------------------------------------
def _bn_tile_kernel(x_ref, gamma_ref, beta_ref, rm_ref, rv_ref,
                    y_ref, nrm_ref, nrv_ref, *, eps, momentum, inv_nm1):
    """One feature tile: batch mean / unbiased batch var, fused normalize
    (y = diff * scale + beta), and running-stat EMA update."""
    x = x_ref[...].astype(jnp.float32)                        # (N, TF)
    mean = jnp.mean(x, axis=0, keepdims=True)                 # (1, TF)
    diff = x - mean                                           # x dead after this
    var = jnp.sum(diff * diff, axis=0, keepdims=True) * inv_nm1
    inv_std = jax.lax.rsqrt(var + eps)                        # (1, TF)
    scale = gamma_ref[...] * inv_std
    y_ref[...] = (diff * scale + beta_ref[...]).astype(y_ref.dtype)
    nrm_ref[...] = (1.0 - momentum) * rm_ref[...] + momentum * mean
    nrv_ref[...] = (1.0 - momentum) * rv_ref[...] + momentum * var


def _fast_path_tile(n, f, itemsize, capacity):
    """Largest feature tile (multiple of 128, or full F when F <= 128) whose
    double-buffered x/y tiles plus ~3 in-kernel (N, tf) f32 temporaries fit in
    about half of VMEM.  Returns None when even the minimum tile does not fit
    (large-batch fallback)."""
    per_lane = 4 * n * itemsize + 12 * n + 128   # x/y 2-buffered + f32 temps + rows
    budget = capacity // 2
    if f <= 128:
        return f if per_lane * max(f, 1) <= budget else None
    tf = (budget // per_lane) // 128 * 128
    if tf < 128:
        return None
    f_pad128 = _round_up(f, 128)
    tf = min(tf, f_pad128)
    # v7x has 2 TensorCores: make sure there are >= 2 feature tiles so
    # dimension_semantics=("parallel",) can shard them.  On 1-TC chips this
    # costs only one extra ~0.35us grid step.
    if tf == f_pad128 and f_pad128 >= 256:
        tf = _round_up(f_pad128 // 2, 128)
    return tf


# ----------------------------------------------------------------------------
# Large-batch fallback: (N, 128) tile no longer fits VMEM -> tile N too.
# Pass 1 accumulates per-feature sum / sum-of-squares over N tiles and
# finalizes scale/shift + running-stat EMAs; pass 2 applies y = x*scale+shift.
# ----------------------------------------------------------------------------
def _bn_stats_kernel(x_ref, gamma_ref, beta_ref, rm_ref, rv_ref,
                     scale_ref, shift_ref, nrm_ref, nrv_ref,
                     sum_ref, sq_ref, *, eps, momentum, inv_nm1, n, tn):
    ni = pl.program_id(1)

    @pl.when(ni == 0)
    def _():
        sum_ref[...] = jnp.zeros_like(sum_ref)
        sq_ref[...] = jnp.zeros_like(sq_ref)

    x = x_ref[...].astype(jnp.float32)                        # (TN, TF)
    # Mask padded rows of the (possibly partial) last N block: unlike lane
    # padding, sublane garbage WOULD feed the reduction.
    row = jax.lax.broadcasted_iota(jnp.int32, x.shape, 0) + ni * tn
    x = jnp.where(row < n, x, 0.0)
    sum_ref[...] += jnp.sum(x, axis=0, keepdims=True)
    sq_ref[...] += jnp.sum(x * x, axis=0, keepdims=True)

    @pl.when(ni == pl.num_programs(1) - 1)
    def _():
        mean = sum_ref[...] * (1.0 / n)
        var = (sq_ref[...] - n * mean * mean) * inv_nm1
        var = jnp.maximum(var, 0.0)          # guard one-pass cancellation
        inv_std = jax.lax.rsqrt(var + eps)
        s = gamma_ref[...] * inv_std
        scale_ref[...] = s
        shift_ref[...] = beta_ref[...] - s * mean
        nrm_ref[...] = (1.0 - momentum) * rm_ref[...] + momentum * mean
        nrv_ref[...] = (1.0 - momentum) * rv_ref[...] + momentum * var


def _bn_apply_kernel(x_ref, scale_ref, shift_ref, y_ref):
    y_ref[...] = (x_ref[...].astype(jnp.float32) * scale_ref[...]
                  + shift_ref[...]).astype(y_ref.dtype)


def _fallback_tiles(n, f, itemsize, capacity):
    f_pad128 = _round_up(f, 128)
    tf = f if f <= 128 else min(512, f_pad128)
    per_row = tf * (4 * itemsize + 12) + 64
    budget = capacity // 2
    tn = (budget // per_row) // 8 * 8
    tn = max(8, min(tn, _round_up(n, 8)))
    return tn, tf


def _batchnorm_forward_large_n(x, gamma2, beta2, rm2, rv2, eps, momentum, tn, tf):
    N, F = x.shape
    f32 = jnp.float32
    itemsize = jnp.dtype(x.dtype).itemsize
    capacity = _vmem_capacity_bytes()
    grid_f = pl.cdiv(F, tf)
    grid_n = pl.cdiv(N, tn)

    x_spec = pl.BlockSpec((tn, tf), lambda fi, ni: (ni, fi))
    row_spec = pl.BlockSpec((1, tf), lambda fi, ni: (0, fi))

    vmem_bytes = 4 * tn * tf * itemsize + 12 * tn * tf + 300 * tf + (2 << 20)
    vmem_bytes = min(capacity, max(int(vmem_bytes), 16 << 20))

    stats = functools.partial(
        _bn_stats_kernel, eps=float(eps), momentum=float(momentum),
        inv_nm1=_inv_nm1(N), n=N, tn=tn)
    scale, shift, new_rm, new_rv = pl.pallas_call(
        stats,
        grid=(grid_f, grid_n),
        out_shape=tuple(jax.ShapeDtypeStruct((1, F), f32) for _ in range(4)),
        in_specs=[x_spec, row_spec, row_spec, row_spec, row_spec],
        out_specs=(row_spec, row_spec, row_spec, row_spec),
        scratch_shapes=[pltpu.VMEM((1, tf), f32), pltpu.VMEM((1, tf), f32)],
        compiler_params=pltpu.CompilerParams(
            dimension_semantics=("parallel", "arbitrary"),
            vmem_limit_bytes=vmem_bytes),
        cost_estimate=pl.CostEstimate(
            flops=int(4 * N * F), transcendentals=int(F),
            bytes_accessed=int(N * F * itemsize + 8 * F * 4)),
    )(x, gamma2, beta2, rm2, rv2)

    y = pl.pallas_call(
        _bn_apply_kernel,
        grid=(grid_f, grid_n),
        out_shape=jax.ShapeDtypeStruct((N, F), x.dtype),
        in_specs=[x_spec, row_spec, row_spec],
        out_specs=x_spec,
        compiler_params=pltpu.CompilerParams(
            dimension_semantics=("parallel", "parallel"),
            vmem_limit_bytes=vmem_bytes),
        cost_estimate=pl.CostEstimate(
            flops=int(2 * N * F), transcendentals=0,
            bytes_accessed=int(2 * N * F * itemsize + 2 * F * 4)),
    )(x, scale, shift)

    return y, new_rm[0], new_rv[0]


# ----------------------------------------------------------------------------
# Public wrapper.
# ----------------------------------------------------------------------------
def batchnorm_forward(x, gamma, beta, running_mean, running_var,
                      eps=1e-5, momentum=0.1, tile_f=None):
    """Training-mode BatchNorm forward matching the PyTorch module.

    x: (N, F).  Returns (y, new_running_mean, new_running_var).
    """
    N, F = x.shape
    f32 = jnp.float32
    itemsize = jnp.dtype(x.dtype).itemsize
    capacity = _vmem_capacity_bytes()

    gamma2 = gamma.reshape(1, F).astype(f32)
    beta2 = beta.reshape(1, F).astype(f32)
    rm2 = running_mean.reshape(1, F).astype(f32)
    rv2 = running_var.reshape(1, F).astype(f32)

    tf = tile_f if tile_f is not None else _fast_path_tile(N, F, itemsize, capacity)
    if tf is None:
        tn, tff = _fallback_tiles(N, F, itemsize, capacity)
        return _batchnorm_forward_large_n(x, gamma2, beta2, rm2, rv2,
                                          eps, momentum, tn, tff)

    grid = (pl.cdiv(F, tf),)
    x_spec = pl.BlockSpec((N, tf), lambda j: (0, j))
    row_spec = pl.BlockSpec((1, tf), lambda j: (0, j))

    # Scoped-VMEM limit sized to the real working set: double-buffered x & y
    # tiles, ~3 (N, tf) f32 in-kernel temporaries, param/stat rows, + headroom.
    vmem_bytes = 4 * N * tf * itemsize + 12 * N * tf + 80 * tf + (2 << 20)
    vmem_bytes = min(capacity, max(int(vmem_bytes), 16 << 20))

    kernel = functools.partial(
        _bn_tile_kernel, eps=float(eps), momentum=float(momentum),
        inv_nm1=_inv_nm1(N))

    cost = pl.CostEstimate(
        flops=int(8 * N * F),
        transcendentals=int(F),
        bytes_accessed=int(2 * N * F * itemsize + 6 * F * 4),
    )

    y, new_rm, new_rv = pl.pallas_call(
        kernel,
        grid=grid,
        out_shape=(
            jax.ShapeDtypeStruct((N, F), x.dtype),
            jax.ShapeDtypeStruct((1, F), f32),
            jax.ShapeDtypeStruct((1, F), f32),
        ),
        in_specs=[x_spec, row_spec, row_spec, row_spec, row_spec],
        out_specs=(x_spec, row_spec, row_spec),
        compiler_params=pltpu.CompilerParams(
            dimension_semantics=("parallel",),
            vmem_limit_bytes=vmem_bytes),
        cost_estimate=cost,
    )(x, gamma2, beta2, rm2, rv2)

    return y, new_rm[0], new_rv[0]


if __name__ == "__main__":
    key = jax.random.PRNGKey(0)

    def reference(x, gamma, beta, rm, rv, eps, momentum):
        mean = jnp.mean(x, axis=0)
        var = jnp.var(x, axis=0, ddof=1)        # torch.var default: unbiased
        y = gamma * (x - mean) / jnp.sqrt(var + eps) + beta
        nrm = (1 - momentum) * rm + momentum * mean
        nrv = (1 - momentum) * rv + momentum * var
        return y, nrm, nrv

    # --- main demo: BatchNorm(num_feats) on a (batch, num_feats) input -------
    batch, num_feats = 8, 32
    x = jax.random.normal(key, (batch, num_feats), dtype=jnp.float32)
    gamma = jnp.ones((num_feats,), jnp.float32)
    beta = jnp.zeros((num_feats,), jnp.float32)
    running_mean = jnp.zeros((num_feats,), jnp.float32)
    running_var = jnp.zeros((num_feats,), jnp.float32)

    y, nrm, nrv = batchnorm_forward(x, gamma, beta, running_mean, running_var,
                                    eps=1e-5, momentum=0.1)
    jax.block_until_ready((y, nrm, nrv))
    y_r, nrm_r, nrv_r = reference(x, gamma, beta, running_mean, running_var,
                                  1e-5, 0.1)
    assert jnp.allclose(y, y_r, atol=1e-5, rtol=1e-5)
    assert jnp.allclose(nrm, nrm_r, atol=1e-6)
    assert jnp.allclose(nrv, nrv_r, atol=1e-6)

    # --- multi-tile fast path with a partial last feature block (F % 128) ----
    k1, k2 = jax.random.split(key)
    n2, f2 = 16, 300
    x2 = jax.random.normal(k1, (n2, f2), jnp.float32)
    g2 = jax.random.normal(k2, (f2,), jnp.float32)
    b2 = jnp.full((f2,), 0.5, jnp.float32)
    z2 = jnp.zeros((f2,), jnp.float32)
    y2, nrm2, nrv2 = batchnorm_forward(x2, g2, b2, z2, z2, tile_f=128)
    jax.block_until_ready((y2, nrm2, nrv2))
    y2_r, nrm2_r, nrv2_r = reference(x2, g2, b2, z2, z2, 1e-5, 0.1)
    assert jnp.allclose(y2, y2_r, atol=1e-5, rtol=1e-5)
    assert jnp.allclose(nrm2, nrm2_r, atol=1e-6)
    assert jnp.allclose(nrv2, nrv2_r, atol=1e-5)

    # --- large-batch fallback path (forced small tiles; partial N/F blocks) --
    n3, f3 = 20, 200
    x3 = jax.random.normal(k2, (n3, f3), jnp.float32) + 3.0
    g3 = jnp.ones((f3,), jnp.float32)
    b3 = jnp.zeros((f3,), jnp.float32)
    z3 = jnp.zeros((f3,), jnp.float32)
    y3, nrm3, nrv3 = _batchnorm_forward_large_n(
        x3, g3.reshape(1, f3), b3.reshape(1, f3),
        z3.reshape(1, f3), z3.reshape(1, f3), 1e-5, 0.1, tn=8, tf=128)
    jax.block_until_ready((y3, nrm3, nrv3))
    y3_r, nrm3_r, nrv3_r = reference(x3, g3, b3, z3, z3, 1e-5, 0.1)
    assert jnp.allclose(y3, y3_r, atol=1e-4, rtol=1e-4)
    assert jnp.allclose(nrm3, nrm3_r, atol=1e-5)
    assert jnp.allclose(nrv3, nrv3_r, atol=1e-4)

    print("KERNEL_OK")
</pallas_src>

<mosaic_0001>
module attributes {stable_mosaic.version = 11 : i64} {
  func.func @_bn_tile_kernel(%arg0: i32, %arg1: memref<8x32xf32, #tpu.memory_space<vmem>>, %arg2: memref<1x32xf32, #tpu.memory_space<vmem>>, %arg3: memref<1x32xf32, #tpu.memory_space<vmem>>, %arg4: memref<1x32xf32, #tpu.memory_space<vmem>>, %arg5: memref<1x32xf32, #tpu.memory_space<vmem>>, %arg6: memref<8x32xf32, #tpu.memory_space<vmem>>, %arg7: memref<1x32xf32, #tpu.memory_space<vmem>>, %arg8: memref<1x32xf32, #tpu.memory_space<vmem>>) attributes {dimension_semantics = [#tpu.dimension_semantics<parallel>], iteration_bounds = array<i64: 1>, scalar_prefetch = 0 : i64, scratch_operands = 0 : i64, tpu.core_type = #tpu.core_type<tc>, window_params = [{transform_indices = @transform_0, window_bounds = array<i64: 8, 32>}, {transform_indices = @transform_1, window_bounds = array<i64: 1, 32>}, {transform_indices = @transform_2, window_bounds = array<i64: 1, 32>}, {transform_indices = @transform_3, window_bounds = array<i64: 1, 32>}, {transform_indices = @transform_4, window_bounds = array<i64: 1, 32>}, {transform_indices = @transform_5, window_bounds = array<i64: 8, 32>}, {transform_indices = @transform_6, window_bounds = array<i64: 1, 32>}, {transform_indices = @transform_7, window_bounds = array<i64: 1, 32>}]} {
    %c0 = arith.constant 0 : index
    %c0_0 = arith.constant 0 : index
    %0 = vector.load %arg1[%c0, %c0_0] : memref<8x32xf32, #tpu.memory_space<vmem>>, vector<8x32xf32>
    %cst = arith.constant dense<0.000000e+00> : vector<32xf32>
    %1 = vector.multi_reduction <add>, %0, %cst [0] : vector<8x32xf32> to vector<32xf32>
    %2 = vector.shape_cast %1 : vector<32xf32> to vector<1x32xf32>
    %cst_1 = arith.constant 8.000000e+00 : f32
    %3 = vector.broadcast %cst_1 : f32 to vector<1x32xf32>
    %4 = arith.divf %2, %3 : vector<1x32xf32>
    %5 = vector.broadcast %4 : vector<1x32xf32> to vector<8x32xf32>
    %6 = arith.subf %0, %5 : vector<8x32xf32>
    %7 = arith.mulf %6, %6 : vector<8x32xf32>
    %cst_2 = arith.constant dense<0.000000e+00> : vector<32xf32>
    %8 = vector.multi_reduction <add>, %7, %cst_2 [0] : vector<8x32xf32> to vector<32xf32>
    %9 = vector.shape_cast %8 : vector<32xf32> to vector<1x32xf32>
    %cst_3 = arith.constant 0.142857149 : f32
    %10 = vector.broadcast %cst_3 : f32 to vector<1x32xf32>
    %11 = arith.mulf %9, %10 : vector<1x32xf32>
    %cst_4 = arith.constant 9.99999974E-6 : f32
    %12 = vector.broadcast %cst_4 : f32 to vector<1x32xf32>
    %13 = arith.addf %11, %12 : vector<1x32xf32>
    %14 = math.rsqrt %13 : vector<1x32xf32>
    %c0_5 = arith.constant 0 : index
    %c0_6 = arith.constant 0 : index
    %15 = vector.load %arg2[%c0_5, %c0_6] : memref<1x32xf32, #tpu.memory_space<vmem>>, vector<1x32xf32>
    %16 = arith.mulf %15, %14 : vector<1x32xf32>
    %17 = vector.broadcast %16 : vector<1x32xf32> to vector<8x32xf32>
    %18 = arith.mulf %6, %17 : vector<8x32xf32>
    %c0_7 = arith.constant 0 : index
    %c0_8 = arith.constant 0 : index
    %19 = vector.load %arg3[%c0_7, %c0_8] : memref<1x32xf32, #tpu.memory_space<vmem>>, vector<1x32xf32>
    %20 = vector.broadcast %19 : vector<1x32xf32> to vector<8x32xf32>
    %21 = arith.addf %18, %20 : vector<8x32xf32>
    %c0_9 = arith.constant 0 : index
    %c0_10 = arith.constant 0 : index
    %22 = vector.load %arg6[%c0_9, %c0_10] : memref<8x32xf32, #tpu.memory_space<vmem>>, vector<8x32xf32>
    tpu.vector_store %arg6[%c0_9, %c0_10], %21 {strides = array<i32>} : memref<8x32xf32, #tpu.memory_space<vmem>>, vector<8x32xf32>,
    %c0_11 = arith.constant 0 : index
    %c0_12 = arith.constant 0 : index
    %23 = vector.load %arg4[%c0_11, %c0_12] : memref<1x32xf32, #tpu.memory_space<vmem>>, vector<1x32xf32>
    %cst_13 = arith.constant 0.899999976 : f32
    %24 = vector.broadcast %cst_13 : f32 to vector<1x32xf32>
    %25 = arith.mulf %24, %23 : vector<1x32xf32>
    %cst_14 = arith.constant 1.000000e-01 : f32
    %26 = vector.broadcast %cst_14 : f32 to vector<1x32xf32>
    %27 = arith.mulf %26, %4 : vector<1x32xf32>
    %28 = arith.addf %25, %27 : vector<1x32xf32>
    %c0_15 = arith.constant 0 : index
    %c0_16 = arith.constant 0 : index
    %29 = vector.load %arg7[%c0_15, %c0_16] : memref<1x32xf32, #tpu.memory_space<vmem>>, vector<1x32xf32>
    tpu.vector_store %arg7[%c0_15, %c0_16], %28 {strides = array<i32>} : memref<1x32xf32, #tpu.memory_space<vmem>>, vector<1x32xf32>,
    %c0_17 = arith.constant 0 : index
    %c0_18 = arith.constant 0 : index
    %30 = vector.load %arg5[%c0_17, %c0_18] : memref<1x32xf32, #tpu.memory_space<vmem>>, vector<1x32xf32>
    %cst_19 = arith.constant 0.899999976 : f32
    %31 = vector.broadcast %cst_19 : f32 to vector<1x32xf32>
    %32 = arith.mulf %31, %30 : vector<1x32xf32>
    %cst_20 = arith.constant 1.000000e-01 : f32
    %33 = vector.broadcast %cst_20 : f32 to vector<1x32xf32>
    %34 = arith.mulf %33, %11 : vector<1x32xf32>
    %35 = arith.addf %32, %34 : vector<1x32xf32>
    %c0_21 = arith.constant 0 : index
    %c0_22 = arith.constant 0 : index
    %36 = vector.load %arg8[%c0_21, %c0_22] : memref<1x32xf32, #tpu.memory_space<vmem>>, vector<1x32xf32>
    tpu.vector_store %arg8[%c0_21, %c0_22], %35 {strides = array<i32>} : memref<1x32xf32, #tpu.memory_space<vmem>>, vector<1x32xf32>,
    return
  }
  func.func @transform_0(%arg0: i32) -> (i32, i32) {
    %c0_i32 = arith.constant 0 : i32
    %c0_i32_0 = arith.constant 0 : i32
    return %c0_i32, %arg0 : i32, i32
  }
  func.func @transform_1(%arg0: i32) -> (i32, i32) {
    %c0_i32 = arith.constant 0 : i32
    %c0_i32_0 = arith.constant 0 : i32
    return %c0_i32, %arg0 : i32, i32
  }
  func.func @transform_2(%arg0: i32) -> (i32, i32) {
    %c0_i32 = arith.constant 0 : i32
    %c0_i32_0 = arith.constant 0 : i32
    return %c0_i32, %arg0 : i32, i32
  }
  func.func @transform_3(%arg0: i32) -> (i32, i32) {
    %c0_i32 = arith.constant 0 : i32
    %c0_i32_0 = arith.constant 0 : i32
    return %c0_i32, %arg0 : i32, i32
  }
  func.func @transform_4(%arg0: i32) -> (i32, i32) {
    %c0_i32 = arith.constant 0 : i32
    %c0_i32_0 = arith.constant 0 : i32
    return %c0_i32, %arg0 : i32, i32
  }
  func.func @transform_5(%arg0: i32) -> (i32, i32) {
    %c0_i32 = arith.constant 0 : i32
    %c0_i32_0 = arith.constant 0 : i32
    return %c0_i32, %arg0 : i32, i32
  }
  func.func @transform_6(%arg0: i32) -> (i32, i32) {
    %c0_i32 = arith.constant 0 : i32
    %c0_i32_0 = arith.constant 0 : i32
    return %c0_i32, %arg0 : i32, i32
  }
  func.func @transform_7(%arg0: i32) -> (i32, i32) {
    %c0_i32 = arith.constant 0 : i32
    %c0_i32_0 = arith.constant 0 : i32
    return %c0_i32, %arg0 : i32, i32
  }
}

</mosaic_0001>

<llo_original>
// kernel: tpu_custom_call.1
$region0: #{tpu_custom_call.1}
  #allocation0 [shape = 'u32[]', space=smem, size = 0x4, offset = 0x4, fixed_abs, tag = 'smem constant byte address 0x4 - core index']
  #allocation1 [shape = 'u32[72,128]{1,0:T(1,128)}', space=vmem, size = 0x9000, scoped, tag = 'internal scratch']
  %s0 = inlined_call_operand.hbm [shape: f32[8,32], index: 0, kind: input, shape index: {}]
  %s1 = inlined_call_operand.hbm [shape: f32[1,32], index: 1, kind: input, shape index: {}]
  %s2 = inlined_call_operand.vmem [shape: f32[1,32], index: 2, kind: input, shape index: {}]
  %s3 = inlined_call_operand.vmem [shape: f32[1,32], index: 3, kind: input, shape index: {}]
  %s4 = inlined_call_operand.vmem [shape: f32[1,32], index: 4, kind: input, shape index: {}]
  %s5 = inlined_call_operand.hbm [shape: f32[8,32], index: 5, kind: output, shape index: {0}]
  %s6 = inlined_call_operand.hbm [shape: f32[1,32], index: 6, kind: output, shape index: {1}]
  %s7 = inlined_call_operand.hbm [shape: f32[1,32], index: 7, kind: output, shape index: {2}]
  %8 = xla_tuple %s5, %s6, %s7
  %s9 = sld [smem:[#allocation0]]
  $region54: #{tpu_custom_call.1} parent=0
    _
  %s11 = ssub.s32 1, %s9
  %s12 = scalar_select 0, %s11, %s9
  $region1: #{tpu_custom_call.1} parent=0
    #allocation2 [shape = 'u8[4096]{0}', space=vmem, size = 0x1000, scoped, tag = 'input window, operand 0, single buffered']
    #allocation3 [shape = 's32[1]{0}', space=sflag, size = 0x4, scoped, tag = 'scoped memory for tpu_custom_call.1']
    #allocation4 [shape = 's32[1]{0}', space=sflag, size = 0x4, scoped, tag = 'scoped memory for tpu_custom_call.1']
    #allocation5 [shape = 'u8[512]{0}', space=vmem, size = 0x400, scoped, tag = 'input window, operand 1, single buffered']
    #allocation6 [shape = 's32[1]{0}', space=sflag, size = 0x4, scoped, tag = 'scoped memory for tpu_custom_call.1']
    #allocation7 [shape = 'u8[4096]{0}', space=vmem, size = 0x1000, scoped, tag = 'output window, operand 0, single buffered']
    #allocation8 [shape = 'u8[512]{0}', space=vmem, size = 0x400, scoped, tag = 'output window, operand 1, single buffered']
    #allocation9 [shape = 's32[1]{0}', space=sflag, size = 0x4, scoped, tag = 'scoped memory for tpu_custom_call.1']
    #allocation10 [shape = 'u8[512]{0}', space=vmem, size = 0x400, scoped, tag = 'output window, operand 2, single buffered']
    %13 = vsyncpa [#allocation3], 0
    %14 = vsyncpa [#allocation6], 0
    %15 = vsyncpa [#allocation4], 0
    %16 = vsyncpa [#allocation9], 0
    // Predicated region
    $region2: #{tpu_custom_call.1} parent=1 // pred_check
      _
    $region3: #{tpu_custom_call.1} parent=1 // pred_check_branch
      %18 = sbr.rel (0) target = $region5
    $region4: #{tpu_custom_call.1} parent=1 // pred_region
      %20 = vsyncadd [#allocation3], 0
      %s22 = sshll.u32 %s0, 4
      %s23 = int_to_ptr.hbm [resolvable:$true] %s22
      %s24 = sshll.u32 [#allocation2], 4
      %s25 = int_to_ptr.vmem [resolvable:$true] %s24
      %27 = dma.hbm_to_vmem [thread:$0]  %s23, 128, %s25, [#allocation3]
    $region5: #{tpu_custom_call.1} parent=1 // pred_fallthru
      _
    // Predicated region
    $region6: #{tpu_custom_call.1} parent=1 // pred_check
      _
    $region7: #{tpu_custom_call.1} parent=1 // pred_check_branch
      %29 = sbr.rel (0) target = $region9
    $region8: #{tpu_custom_call.1} parent=1 // pred_region
      %31 = vsyncadd [#allocation6], 0
      %s33 = sshll.u32 %s1, 4
      %s34 = int_to_ptr.hbm [resolvable:$true] %s33
      %s35 = sshll.u32 [#allocation5], 4
      %s36 = int_to_ptr.vmem [resolvable:$true] %s35
      %38 = dma.hbm_to_vmem [thread:$0]  %s34, 16, %s36, [#allocation6]
    $region9: #{tpu_custom_call.1} parent=1 // pred_fallthru
      _
    // Predicated region
    $region10: #{tpu_custom_call.1} parent=1 // pred_check
      _
    $region11: #{tpu_custom_call.1} parent=1 // pred_check_branch
      %40 = sbr.rel (0) target = $region13
    $region12: #{tpu_custom_call.1} parent=1 // pred_region
      _
    $region13: #{tpu_custom_call.1} parent=1 // pred_fallthru
      _
    // Predicated region
    $region14: #{tpu_custom_call.1} parent=1 // pred_check
      _
    $region15: #{tpu_custom_call.1} parent=1 // pred_check_branch
      %42 = sbr.rel (0) target = $region17
    $region16: #{tpu_custom_call.1} parent=1 // pred_region
      _
    $region17: #{tpu_custom_call.1} parent=1 // pred_fallthru
      _
    // Predicated region
    $region18: #{tpu_custom_call.1} parent=1 // pred_check
      _
    $region19: #{tpu_custom_call.1} parent=1 // pred_check_branch
      %44 = sbr.rel (0) target = $region21
    $region20: #{tpu_custom_call.1} parent=1 // pred_region
      _
    $region21: #{tpu_custom_call.1} parent=1 // pred_fallthru
      _
    // Predicated region
    $region22: #{tpu_custom_call.1} parent=1 // pred_check
      _
    $region23: #{tpu_custom_call.1} parent=1 // pred_check_branch
      %46 = sbr.rel (0) target = $region25
    $region24: #{tpu_custom_call.1} parent=1 // pred_region
      %48 = dma.done [#allocation3], 128
    $region25: #{tpu_custom_call.1} parent=1 // pred_fallthru
      _
    // Predicated region
    $region26: #{tpu_custom_call.1} parent=1 // pred_check
      _
    $region27: #{tpu_custom_call.1} parent=1 // pred_check_branch
      %50 = sbr.rel (0) target = $region29
    $region28: #{tpu_custom_call.1} parent=1 // pred_region
      %52 = dma.done [#allocation6], 16
    $region29: #{tpu_custom_call.1} parent=1 // pred_fallthru
      _
    %v53 = vld [vmem:[#allocation2] sm:$0xff]
    %vm54 = vcmask 261120
    %v55 = vsel %vm54, %v53, 0.0
    %v56 = vrot.slane %v55, 4
    %v57 = vadd.f32 %v55, %v56
    %v58 = vrot.slane %v57, 2
    %v59 = vadd.f32 %v57, %v58
    %v60 = vrot.slane %v59, 1
    %v61 = vadd.f32 %v59, %v60
    %v62 = vrcp.pop 8.0
    %v63 = vmul.f32 8.0, %v62
    %v64 = vsub.f32 1.0, %v63
    %v65 = vmul.f32 %v62, %v64
    %v66 = vadd.f32 %v62, %v65
    %vm67 = vweird.f32 %v62
    %v68 = vsel %vm67, %v62, %v66
    %v69 = vmul.f32 %v61, %v68
    %v70 = vsub.f32 %v53, %v69
    %v71 = vmul.f32 %v70, %v70
    %v72 = vsel %vm54, %v71, 0.0
    %v73 = vrot.slane %v72, 4
    %v74 = vadd.f32 %v72, %v73
    %v75 = vrot.slane %v74, 2
    %v76 = vadd.f32 %v74, %v75
    %v77 = vrot.slane %v76, 1
    %v78 = vadd.f32 %v76, %v77
    %v79 = vmul.f32 %v78, 0.14285715
    %v80 = vadd.f32 %v79, 1e-05
    %v81 = vrsqrt.pop %v80
    %v82 = vmul.f32 %v81, %v80
    %v83 = vmul.f32 %v82, %v81
    %v84 = vmul.f32 0.5, %v83
    %v85 = vsub.f32 1.5, %v84
    %v86 = vmul.f32 %v81, %v85
    %vm87 = vweird.f32 %v80
    %vm88 = vweird.f32 %v81
    %vm89 = vmor %vm87, %vm88
    %v90 = vsel %vm89, %v81, %v86
    %v91 = vld [vmem:[#allocation5] sm:$0x1]
    %v92 = vmul.f32 %v91, %v90
    %v94 = vperm.slane %v92, 0
    %v96 = vmul.f32 %v70, %v94
    %v97 = vld [vmem:[%s2] sm:$0x1]
    %v99 = vperm.slane %v97, 0
    %v101 = vadd.f32 %v96, %v99
    %102 = vst.msk [vmem:[#allocation7] sm:$0xff] %vm54, %v101
    %v103 = vld [vmem:[%s3] sm:$0x1]
    %v104 = vmul.f32 %v103, 0.9
    %v105 = vmul.f32 %v69, 0.1
    %v106 = vadd.f32 %v104, %v105
    %vm107 = vcmask 253952
    %108 = vst.msk [vmem:[#allocation8] sm:$0x1] %vm107, %v106
    %v109 = vld [vmem:[%s4] sm:$0x1]
    %v110 = vmul.f32 %v109, 0.9
    %v111 = vmul.f32 %v79, 0.1
    %v112 = vadd.f32 %v110, %v111
    %113 = vst.msk [vmem:[#allocation10] sm:$0x1] %vm107, %v112
    // Predicated region
    $region30: #{tpu_custom_call.1} parent=1 // pred_check
      _
    $region31: #{tpu_custom_call.1} parent=1 // pred_check_branch
      %115 = sbr.rel (0) target = $region33
    $region32: #{tpu_custom_call.1} parent=1 // pred_region
      %117 = vsyncadd [#allocation4], 0
      %s119 = sshll.u32 [#allocation7], 4
      %s120 = int_to_ptr.vmem [resolvable:$true] %s119
      %s121 = sshll.u32 %s5, 4
      %s122 = int_to_ptr.hbm [resolvable:$true] %s121
      %124 = dma.vmem_to_hbm [thread:$0]  %s120, 128, %s122, [#allocation4]
    $region33: #{tpu_custom_call.1} parent=1 // pred_fallthru
      _
    // Predicated region
    $region34: #{tpu_custom_call.1} parent=1 // pred_check
      _
    $region35: #{tpu_custom_call.1} parent=1 // pred_check_branch
      %126 = sbr.rel (0) target = $region37
    $region36: #{tpu_custom_call.1} parent=1 // pred_region
      %128 = vsyncadd [#allocation9], 0
      %s130 = sshll.u32 [#allocation8], 4
      %s131 = int_to_ptr.vmem [resolvable:$true] %s130
      %s132 = sshll.u32 %s6, 4
      %s133 = int_to_ptr.hbm [resolvable:$true] %s132
      %135 = dma.vmem_to_hbm [thread:$0]  %s131, 16, %s133, [#allocation9]
    $region37: #{tpu_custom_call.1} parent=1 // pred_fallthru
      _
    // Predicated region
    $region38: #{tpu_custom_call.1} parent=1 // pred_check
      _
    $region39: #{tpu_custom_call.1} parent=1 // pred_check_branch
      %137 = sbr.rel (0) target = $region41
    $region40: #{tpu_custom_call.1} parent=1 // pred_region
      %139 = vsyncadd [#allocation9], 0
      %s141 = sshll.u32 [#allocation10], 4
      %s142 = int_to_ptr.vmem [resolvable:$true] %s141
      %s143 = sshll.u32 %s7, 4
      %s144 = int_to_ptr.hbm [resolvable:$true] %s143
      %146 = dma.vmem_to_hbm [thread:$0]  %s142, 16, %s144, [#allocation9]
    $region41: #{tpu_custom_call.1} parent=1 // pred_fallthru
      _
    // Predicated region
    $region42: #{tpu_custom_call.1} parent=1 // pred_check
      _
    $region43: #{tpu_custom_call.1} parent=1 // pred_check_branch
      %148 = sbr.rel (0) target = $region45
    $region44: #{tpu_custom_call.1} parent=1 // pred_region
      %150 = dma.done [#allocation4], 128
    $region45: #{tpu_custom_call.1} parent=1 // pred_fallthru
      _
    // Predicated region
    $region46: #{tpu_custom_call.1} parent=1 // pred_check
      _
    $region47: #{tpu_custom_call.1} parent=1 // pred_check_branch
      %152 = sbr.rel (0) target = $region49
    $region48: #{tpu_custom_call.1} parent=1 // pred_region
      %154 = dma.done [#allocation9], 16
    $region49: #{tpu_custom_call.1} parent=1 // pred_fallthru
      _
    // Predicated region
    $region50: #{tpu_custom_call.1} parent=1 // pred_check
      _
    $region51: #{tpu_custom_call.1} parent=1 // pred_check_branch
      %156 = sbr.rel (0) target = $region53
    $region52: #{tpu_custom_call.1} parent=1 // pred_region
      %158 = dma.done [#allocation9], 16
    $region53: #{tpu_custom_call.1} parent=1 // pred_fallthru
      _
    %159 = vsyncpa [#allocation3], 1
    %160 = vsyncpa [#allocation6], 1
    %161 = vsyncpa [#allocation4], 1
    %162 = vsyncpa [#allocation9], 1

</llo_original>
